<compile_context>
chip_gen: v6e
topology: v6e:2x2x1
jax: 0.10.0
libtpu: 0.0.40
codegen_flags: <defaults>
</compile_context>

<pallas_src>
import functools
import math

import jax
import jax.numpy as jnp
from jax.experimental import pallas as pl
from jax.experimental.pallas import tpu as pltpu

_LANES = 128
_MAX_ROWS = 1024  # 1024 x 128 f32 = 512 KiB per tile (fits VMEM on all gens)


def _drop_path_kernel(keep_ref, x_ref, o_ref, *, inv_keep_prob):
    # keep_ref: (N,) int32 in SMEM (scalar prefetch); one 0/1 flag per sample.
    i = pl.program_id(0)
    scale = keep_ref[i].astype(jnp.float32) * jnp.float32(inv_keep_prob)
    o_ref[...] = x_ref[...] * scale.astype(x_ref.dtype)


def drop_path(x, drop_prob: float = 0.0, training: bool = False, seed: int = 0):
    if drop_prob == 0.0 or not training:
        return x
    keep_prob = 1.0 - float(drop_prob)

    n = x.shape[0]
    L = math.prod(x.shape[1:])

    # Per-sample Bernoulli(keep_prob) mask, same construction as the PyTorch
    # reference: floor(keep_prob + U[0,1)).
    key = jax.random.PRNGKey(seed)
    u = jax.random.uniform(key, (n,), dtype=jnp.float32)
    keep_i32 = jnp.floor(jnp.float32(keep_prob) + u).astype(jnp.int32)

    # Lane/sublane-dense layout: (N, R, 128) with R a multiple of 8, and R a
    # multiple of the row tile so every block is full (unmasked stores).
    rows_needed = pl.cdiv(L, _LANES)
    tile_r = min(_MAX_ROWS, ((rows_needed + 7) // 8) * 8)
    R = ((rows_needed + tile_r - 1) // tile_r) * tile_r
    Lp = R * _LANES

    flat = x.reshape(n, L)
    if Lp != L:
        flat = jnp.pad(flat, ((0, 0), (0, Lp - L)))
    flat = flat.reshape(n, R, _LANES)

    grid = (n, R // tile_r)

    out = pl.pallas_call(
        functools.partial(_drop_path_kernel, inv_keep_prob=1.0 / keep_prob),
        out_shape=jax.ShapeDtypeStruct((n, R, _LANES), x.dtype),
        grid_spec=pltpu.PrefetchScalarGridSpec(
            num_scalar_prefetch=1,
            grid=grid,
            in_specs=[
                pl.BlockSpec((1, tile_r, _LANES), lambda i, j, keep: (i, j, 0)),
            ],
            out_specs=pl.BlockSpec((1, tile_r, _LANES), lambda i, j, keep: (i, j, 0)),
        ),
        compiler_params=pltpu.CompilerParams(
            # No loop-carried state: fully parallel (sharded across TCs on v7x).
            dimension_semantics=("parallel", "parallel"),
        ),
    )(keep_i32, flat)

    out = out.reshape(n, Lp)
    if Lp != L:
        out = out[:, :L]
    return out.reshape(x.shape)


class DropPath:
    """Mirror of the PyTorch DropPath module (stochastic depth per sample)."""

    def __init__(self, drop_prob=None):
        self.drop_prob = 0.0 if drop_prob is None else float(drop_prob)
        self.training = True  # PyTorch modules default to training mode

    def __call__(self, x, seed: int = 0):
        return drop_path(x, self.drop_prob, self.training, seed)


if __name__ == "__main__":
    key = jax.random.PRNGKey(0)
    x = jax.random.normal(key, (2, 4, 16, 16), dtype=jnp.float32)

    mod = DropPath(drop_prob=0.25)
    mod.training = True
    y = jax.block_until_ready(mod(x, seed=42))
    assert y.shape == x.shape and y.dtype == x.dtype

    # Each sample must be either exactly dropped (all zeros) or scaled by 1/keep_prob.
    keep_prob = 1.0 - mod.drop_prob
    for b in range(x.shape[0]):
        dropped = bool(jnp.all(jnp.abs(y[b]) < 1e-6))
        kept = bool(jnp.allclose(y[b], x[b] / keep_prob, atol=1e-5, rtol=1e-5))
        assert dropped or kept, f"sample {b} is neither dropped nor correctly scaled"

    # Eval mode / drop_prob == 0 -> identity (no kernel launch).
    mod.training = False
    y_eval = jax.block_until_ready(mod(x))
    assert bool(jnp.array_equal(y_eval, x))

    print("KERNEL_OK")
</pallas_src>

<mosaic_0001>
module attributes {stable_mosaic.version = 11 : i64} {
  func.func @_drop_path_kernel(%arg0: i32, %arg1: i32, %arg2: memref<2xi32, #tpu.memory_space<smem>>, %arg3: memref<1x8x128xf32, #tpu.memory_space<vmem>>, %arg4: memref<1x8x128xf32, #tpu.memory_space<vmem>>) attributes {dimension_semantics = [#tpu.dimension_semantics<parallel>, #tpu.dimension_semantics<parallel>], iteration_bounds = array<i64: 2, 1>, scalar_prefetch = 1 : i64, scratch_operands = 0 : i64, tpu.core_type = #tpu.core_type<tc>, window_params = [{transform_indices = @transform_0, window_bounds = array<i64: 1, 8, 128>}, {transform_indices = @transform_1, window_bounds = array<i64: 1, 8, 128>}]} {
    %0 = arith.index_cast %arg0 : i32 to index
    %1 = memref.load %arg2[%0] : memref<2xi32, #tpu.memory_space<smem>>
    %2 = arith.sitofp %1 : i32 to f32
    %cst = arith.constant 1.33333337 : f32
    %3 = arith.mulf %2, %cst : f32
    %c0 = arith.constant 0 : index
    %c0_0 = arith.constant 0 : index
    %c0_1 = arith.constant 0 : index
    %4 = vector.load %arg3[%c0, %c0_0, %c0_1] : memref<1x8x128xf32, #tpu.memory_space<vmem>>, vector<1x8x128xf32>
    %5 = vector.broadcast %3 : f32 to vector<1x8x128xf32>
    %6 = arith.mulf %4, %5 : vector<1x8x128xf32>
    %c0_2 = arith.constant 0 : index
    %c0_3 = arith.constant 0 : index
    %c0_4 = arith.constant 0 : index
    %7 = vector.load %arg4[%c0_2, %c0_3, %c0_4] : memref<1x8x128xf32, #tpu.memory_space<vmem>>, vector<1x8x128xf32>
    tpu.vector_store %arg4[%c0_2, %c0_3, %c0_4], %6 {strides = array<i32>} : memref<1x8x128xf32, #tpu.memory_space<vmem>>, vector<1x8x128xf32>,
    return
  }
  func.func @transform_0(%arg0: i32, %arg1: i32, %arg2: memref<2xi32, #tpu.memory_space<smem>>) -> (i32, i32, i32) {
    %c0_i32 = arith.constant 0 : i32
    %c0_i32_0 = arith.constant 0 : i32
    return %arg0, %arg1, %c0_i32 : i32, i32, i32
  }
  func.func @transform_1(%arg0: i32, %arg1: i32, %arg2: memref<2xi32, #tpu.memory_space<smem>>) -> (i32, i32, i32) {
    %c0_i32 = arith.constant 0 : i32
    %c0_i32_0 = arith.constant 0 : i32
    return %arg0, %arg1, %c0_i32 : i32, i32, i32
  }
}

</mosaic_0001>

<llo_original>
// kernel: tpu_custom_call.1
$region0: #{tpu_custom_call.1}
  #allocation0 [shape = 'u32[]', space=smem, size = 0x4, offset = 0x4, fixed_abs, tag = 'smem constant byte address 0x4 - core index']
  #allocation1 [shape = 'u32[144,128]{1,0:T(1,128)}', space=vmem, size = 0x12000, scoped, tag = 'internal scratch']
  #allocation2 [shape = 's32[1]{0}', space=sflag, size = 0x4, scoped, tag = 'scoped memory for tpu_custom_call.1']
  #allocation3 [shape = 'u8[512]{0}', space=smem, size = 0x200, scoped, tag = 'prefetched SMEM operand 0']
  %s0 = inlined_call_operand.hbm [shape: s32[2], index: 0, kind: input, shape index: {}]
  %s1 = inlined_call_operand.hbm [shape: f32[2,8,128], index: 1, kind: input, shape index: {}]
  %s2 = inlined_call_operand.hbm [shape: f32[2,8,128], index: 2, kind: output, shape index: {}]
  %s3 = sld [smem:[#allocation0]]
  $region41: #{tpu_custom_call.1} parent=0
    _
  %s5 = ssub.s32 1, %s3
  %s6 = scalar_select 0, %s5, %s3
  %8 = dma.hbm_to_smem %s0, 16, [#allocation3], [#allocation2]
  %9 = dma.done [#allocation2], 16
  %10 = sfence
  $region1: #{tpu_custom_call.1} parent=0
    #allocation4 [shape = 'u8[8192]{0}', space=vmem, size = 0x2000, scoped, tag = 'input window, operand 1']
    #allocation5 [shape = 's32[2]{0}', space=sflag, size = 0x8, scoped, tag = 'scoped memory for tpu_custom_call.1']
    #allocation6 [shape = 's32[2]{0}', space=sflag, size = 0x8, scoped, tag = 'scoped memory for tpu_custom_call.1']
    #allocation7 [shape = 'u8[8192]{0}', space=vmem, size = 0x2000, scoped, tag = 'output window, operand 0']
    %11 = vsyncpa [#allocation5], 0
    %s12 = scalar_lea.sflag [#allocation5], 1
    %13 = vsyncpa %s12, 0
    %14 = vsyncpa [#allocation6], 0
    %s15 = scalar_lea.sflag [#allocation6], 1
    %16 = vsyncpa %s15, 0
    loop: start=0, step=1, limit=4
    $region2: #{tpu_custom_call.1} parent=1 // loop_pre_header
      _
    $region3: #{tpu_custom_call.1} parent=1 // loop_header
      %s18 = sphi 0, %s22
      %p19 = scmp.ge.s32.totalorder %s18, 4
      %s25 = sphi 0, %s37
      %s26 = sphi 0, %s33
      %s27 = sphi 0, %s25
      %s28 = sphi 0, %s26
      %s29 = sphi 0, %s27
      %s30 = sphi 0, %s28
      %s42 = sphi 0, %s44
      %s45 = sphi 0, %s42
      %s46 = sphi 0, %s45
      %s62 = sphi 0, %s46
      %s70 = sphi 0, %s72
      %s73 = sphi 0, %s70
      %s74 = sphi 0, %s73
      %s90 = sphi 0, %s74
    $region4: #{tpu_custom_call.1} parent=1 // loop_header_branch
      %21 = sbr.rel (%p19) target = $region8
    $region5: #{tpu_custom_call.1} parent=1 // loop_body
      %s23 = ssub.s32 %s18, 1
      %s24 = ssub.s32 %s18, 2
      %s31 = sadd.s32 1, %s26
      %p32 = scmp.ge.s32.totalorder %s31, 1
      %s33 = scalar_select %p32, 0, %s31
      %s34 = sadd.s32 1, %s25
      %s35 = scalar_select %p32, %s34, %s25
      %p36 = scmp.ge.s32.totalorder %s35, 2
      %s37 = scalar_select %p36, 0, %s35
      %s38 = ssub.s32 %s25, %s37
      %s39 = ssub.s32 %s26, %s33
      %s40 = sor.u32 %s38, %s39
      %p41 = scmp.eq.s32.totalorder %s40, 0
      %s43 = sadd.s32 %s42, 1
      %s44 = scalar_select %p41, %s42, %s43
      %p47 = pneg %p41
      %p48 = scmp.eq.s32.totalorder %s18, 1
      %p49 = por %p47, %p48
      %p50 = scmp.ne.s32.totalorder %s42, %s45
      %p51 = scmp.eq.s32.totalorder %s18, 0
      %p52 = por %p50, %p51
      %p53 = scmp.ne.s32.totalorder %s42, %s45
      %p54 = scmp.eq.s32.totalorder %s23, 1
      %p55 = por %p53, %p54
      %p56 = scmp.ne.s32.totalorder %s45, %s46
      %p57 = scmp.eq.s32.totalorder %s23, 0
      %p58 = por %p56, %p57
      %p59 = scmp.ne.s32.totalorder %s45, %s46
      %p60 = scmp.eq.s32.totalorder %s24, 1
      %p61 = por %p59, %p60
      %p63 = scmp.ne.s32.totalorder %s46, %s62
      %p64 = scmp.eq.s32.totalorder %s24, 0
      %p65 = por %p63, %p64
      %s66 = ssub.s32 %s25, %s37
      %s67 = ssub.s32 %s26, %s33
      %s68 = sor.u32 %s66, %s67
      %p69 = scmp.eq.s32.totalorder %s68, 0
      %s71 = sadd.s32 %s70, 1
      %s72 = scalar_select %p69, %s70, %s71
      %p75 = pneg %p69
      %p76 = scmp.eq.s32.totalorder %s18, 1
      %p77 = por %p75, %p76
      %p78 = scmp.ne.s32.totalorder %s70, %s73
      %p79 = scmp.eq.s32.totalorder %s18, 0
      %p80 = por %p78, %p79
      %p81 = scmp.ne.s32.totalorder %s70, %s73
      %p82 = scmp.eq.s32.totalorder %s23, 1
      %p83 = por %p81, %p82
      %p84 = scmp.ne.s32.totalorder %s73, %s74
      %p85 = scmp.eq.s32.totalorder %s23, 0
      %p86 = por %p84, %p85
      %p87 = scmp.ne.s32.totalorder %s73, %s74
      %p88 = scmp.eq.s32.totalorder %s24, 1
      %p89 = por %p87, %p88
      %p91 = scmp.ne.s32.totalorder %s74, %s90
      %p92 = scmp.eq.s32.totalorder %s24, 0
      %p93 = por %p91, %p92
      %p94 = scmp.le.s32.totalorder 1, %s18
      %p95 = scmp.lt.s32.totalorder %s18, 3
      %p96 = pnand %p94, %p95
      %p97 = pneg %p96
      // Predicated region
      $region9: #{tpu_custom_call.1} parent=5 // pred_check
        _
      $region10: #{tpu_custom_call.1} parent=5 // pred_check_branch
        %99 = sbr.rel (%p96) target = $region12
      $region11: #{tpu_custom_call.1} parent=5 // pred_region
        %s100 = ssub.s32 %s18, 1
      $region12: #{tpu_custom_call.1} parent=5 // pred_fallthru
        _
      %p101 = scmp.lt.s32.totalorder %s18, 2
      // Predicated region
      $region13: #{tpu_custom_call.1} parent=5 // pred_check
        %p102 = pneg %p101
      $region14: #{tpu_custom_call.1} parent=5 // pred_check_branch
        %104 = sbr.rel (%p102) target = $region16
      $region15: #{tpu_custom_call.1} parent=5 // pred_region
        // Predicated region
        $region17: #{tpu_custom_call.1} parent=15 // pred_check
          %p105 = pneg %p52
        $region18: #{tpu_custom_call.1} parent=15 // pred_check_branch
          %107 = sbr.rel (%p105) target = $region20
        $region19: #{tpu_custom_call.1} parent=15 // pred_region
          %s108 = sand.u32 %s42, 1
          %s109 = scalar_lea.sflag [#allocation5], %s108
          %s110 = sand.u32 %s42, 1
          %s111 = smul.addr %s110, 8
          %s112 = scalar_lea.vmem [#allocation4], %s111
          %s114 = ssub.s32 128, 128
          %115 = vsyncadd %s109, %s114
          %s116 = sadd.s32 %s26, %s25
          %s117 = smul.addr %s116, 128
          %s118 = scalar_lea.hbm %s1, %s117
          %s120 = sshll.u32 %s112, 4
          %s121 = int_to_ptr.vmem [resolvable:$true] %s120
          %123 = dma.hbm_to_vmem [thread:$0]  %s118, 128, %s121, %s109
        $region20: #{tpu_custom_call.1} parent=15 // pred_fallthru
          _
      $region16: #{tpu_custom_call.1} parent=5 // pred_fallthru
        _
      %p124 = scmp.le.s32.totalorder 1, %s18
      %p125 = scmp.lt.s32.totalorder %s18, 3
      %p126 = pnand %p124, %p125
      %p127 = pneg %p126
      // Predicated region
      $region21: #{tpu_custom_call.1} parent=5 // pred_check
        _
      $region22: #{tpu_custom_call.1} parent=5 // pred_check_branch
        %129 = sbr.rel (%p126) target = $region24
      $region23: #{tpu_custom_call.1} parent=5 // pred_region
        %s130 = ssub.s32 %s18, 1
        %s131 = sand.u32 %s45, 1
        %s132 = scalar_lea.sflag [#allocation5], %s131
        %s133 = sand.u32 %s45, 1
        %s134 = smul.addr %s133, 8
        %s135 = scalar_lea.vmem [#allocation4], %s134
        // Predicated region
        $region25: #{tpu_custom_call.1} parent=23 // pred_check
          %p136 = pneg %p58
        $region26: #{tpu_custom_call.1} parent=23 // pred_check_branch
          %138 = sbr.rel (%p136) target = $region28
        $region27: #{tpu_custom_call.1} parent=23 // pred_region
          %139 = dma.done %s132, 128
        $region28: #{tpu_custom_call.1} parent=23 // pred_fallthru
          _
        %s140 = sand.u32 %s45, 1
        %s141 = scalar_lea.sflag [#allocation5], %s140
        %s142 = sand.u32 %s45, 1
        %s143 = smul.addr %s142, 8
        %s144 = scalar_lea.vmem [#allocation4], %s143
        %p145 = pneg %p58
        %p146 = pneg %p55
        %p147 = pneg %p86
        %p148 = pneg %p83
        %s149 = sand.u32 %s73, 1
        %s150 = scalar_lea.sflag [#allocation6], %s149
        %s151 = sand.u32 %s73, 1
        %s152 = smul.addr %s151, 8
        %s153 = scalar_lea.vmem [#allocation7], %s152
        %s154 = sld [smem:[#allocation3 + %s27]]
        %s155 = scvt.s32.f32 %s154
        %s156 = smul.f32 %s155, 1.3333334
        %v157 = vld [vmem:[%s135] sm:$0xff]
        %v158 = vstv %s156
        %v159 = vmul.f32 %v157, %v158
        %160 = vst [vmem:[%s153] sm:$0xff] %v159
        %s161 = sand.u32 %s73, 1
        %s162 = scalar_lea.sflag [#allocation6], %s161
        %s163 = sand.u32 %s73, 1
        %s164 = smul.addr %s163, 8
        %s165 = scalar_lea.vmem [#allocation7], %s164
        // Predicated region
        $region29: #{tpu_custom_call.1} parent=23 // pred_check
          %p166 = pneg %p83
        $region30: #{tpu_custom_call.1} parent=23 // pred_check_branch
          %168 = sbr.rel (%p166) target = $region32
        $region31: #{tpu_custom_call.1} parent=23 // pred_region
          %s170 = ssub.s32 128, 128
          %171 = vsyncadd %s162, %s170
          %s172 = sadd.s32 %s28, %s27
          %s173 = smul.addr %s172, 128
          %s174 = scalar_lea.hbm %s2, %s173
          %s176 = sshll.u32 %s165, 4
          %s177 = int_to_ptr.vmem [resolvable:$true] %s176
          %179 = dma.vmem_to_hbm [thread:$0]  %s177, 128, %s174, %s162
        $region32: #{tpu_custom_call.1} parent=23 // pred_fallthru
          _
      $region24: #{tpu_custom_call.1} parent=5 // pred_fallthru
        _
      %p180 = scmp.le.s32.totalorder 2, %s18
      // Predicated region
      $region33: #{tpu_custom_call.1} parent=5 // pred_check
        %p181 = pneg %p180
      $region34: #{tpu_custom_call.1} parent=5 // pred_check_branch
        %183 = sbr.rel (%p181) target = $region36
      $region35: #{tpu_custom_call.1} parent=5 // pred_region
        %s184 = ssub.s32 %s18, 2
        // Predicated region
        $region37: #{tpu_custom_call.1} parent=35 // pred_check
          %p185 = pneg %p89
        $region38: #{tpu_custom_call.1} parent=35 // pred_check_branch
          %187 = sbr.rel (%p185) target = $region40
        $region39: #{tpu_custom_call.1} parent=35 // pred_region
          %s188 = sand.u32 %s74, 1
          %s189 = scalar_lea.sflag [#allocation6], %s188
          %s190 = sand.u32 %s74, 1
          %s191 = smul.addr %s190, 8
          %s192 = scalar_lea.vmem [#allocation7], %s191
          %193 = dma.done %s189, 128
        $region40: #{tpu_custom_call.1} parent=35 // pred_fallthru
          _
      $region36: #{tpu_custom_call.1} parent=5 // pred_fallthru
        _
    $region6: #{tpu_custom_call.1} parent=1 // loop_footer
      %s22 = sadd.s32 1, %s18
    $region7: #{tpu_custom_call.1} parent=1 // loop_footer_branch
      %17 = sbr.rel target = $region3
    $region8: #{tpu_custom_call.1} parent=1 // loop_exit
      _
    %194 = vsyncpa [#allocation5], 1
    %s195 = scalar_lea.sflag [#allocation5], 1
    %196 = vsyncpa %s195, 1
    %197 = vsyncpa [#allocation6], 1
    %s198 = scalar_lea.sflag [#allocation6], 1
    %199 = vsyncpa %s198, 1

</llo_original>
